<compile_context>
chip_gen: v6e
topology: v6e:2x2x1
jax: 0.10.0
libtpu: 0.0.40
codegen_flags: <defaults>
</compile_context>

<pallas_src>
import jax
import jax.numpy as jnp
from jax.experimental import pallas as pl
from jax.experimental.pallas import tpu as pltpu

OUT_W = 8  # lane width of the output block (column 0 holds the probability)


def _round_up(n, m):
    return int(pl.cdiv(int(n), m)) * m


def _choose_tm(B, K):
    """Batch tile.  >=2 grid steps when B >= 256 (v7x megacore); multiple of 16
    (bf16 sublane packing); shrunk if the double-buffered x tile would blow the
    v5e 16 MiB scoped-VMEM default."""
    if B >= 512:
        tm = 256
    elif B >= 256:
        tm = 128
    else:
        tm = _round_up(max(B, 1), 16)
    # v5e guard: keep 2 * (TM, K) bf16 x buffers modest when input_size is huge.
    while tm >= 128 and 2 * tm * K * 2 > (6 << 20):
        tm //= 2
    return tm


def _disc_kernel(x_ref, w1_ref, b1_ref, w2_ref, b2_ref,
                 w3_ref, b3_ref, w4_ref, b4_ref, o_ref):
    """One (TM, K) batch tile -> (TM, OUT_W) probability block (column 0 is real)."""

    def leaky_relu(v):
        return jnp.where(v > 0, v, 0.1 * v)

    x = x_ref[...]                                                   # (TM, K) bf16

    # fc1..fc3: bf16 MXU matmuls, f32 accumulation; bias + activation in f32.
    # b1_ref is (1, H) in the unconditional case and (TM, H) in the conditional
    # case (fc1 bias + gathered class row of w1) — both broadcast correctly.
    h = jnp.dot(x, w1_ref[...], preferred_element_type=jnp.float32) + b1_ref[...]
    h = leaky_relu(h)

    h = jnp.dot(h.astype(jnp.bfloat16), w2_ref[...],
                preferred_element_type=jnp.float32) + b2_ref[...]
    h = leaky_relu(h)

    h = jnp.dot(h.astype(jnp.bfloat16), w3_ref[...],
                preferred_element_type=jnp.float32) + b3_ref[...]
    h = leaky_relu(h)                                                # (TM, H//2) f32

    # fc4 has N=1: VPU multiply + XLU lane reduction instead of an MXU pass.
    logit = jnp.sum(h * w4_ref[...], axis=-1, keepdims=True) + b4_ref[...]  # (TM, 1)

    # sigmoid: exp + reciprocal both on the EUP (free slot); clamp to [0, 1] since
    # the approximate reciprocal can land marginally outside the open interval.
    prob = pl.reciprocal(1.0 + jnp.exp(-logit), approx=True)
    prob = jnp.clip(prob, 0.0, 1.0)                                  # (TM, 1)

    o_ref[...] = jnp.broadcast_to(prob, o_ref.shape)                 # (TM, OUT_W)


def discriminator_forward(x, params, *, conditional=False, y=None, num_classes=10):
    """x: [B, C, H, W] float32 (NCHW).  params: dict of (w, b) per layer,
    weights stored as [in, out] (transposed vs. PyTorch), biases [1, out]."""
    B = x.shape[0]
    x2d = x.reshape(B, -1).astype(jnp.float32)

    w1, b1 = params["fc1"]
    w2, b2 = params["fc2"]
    w3, b3 = params["fc3"]
    w4, b4 = params["fc4"]

    K = x2d.shape[1]
    H = w2.shape[0]

    if conditional:
        assert w1.shape[0] == K + num_classes, (w1.shape, K, num_classes)
        # [x, one_hot(y)] @ w1 + b1  ==  x @ w1[:K] + w1[K + y] + b1.
        # Gather the class row in the wrapper; no concat / K-pad copies of x.
        w1_x = w1[:K]                                                # (K, H)
        cls_rows = jnp.take(w1[K:], y.astype(jnp.int32), axis=0)     # (B, H)
        b1_eff = (b1 + cls_rows).astype(jnp.float32)                 # (B, H) per-row
    else:
        assert w1.shape[0] == K, (w1.shape, K)
        w1_x = w1
        b1_eff = b1.astype(jnp.float32)                              # (1, H)

    TM = _choose_tm(B, K)
    B_pad = int(pl.cdiv(B, TM)) * TM

    # bf16 operands for the MXU; biases / fc4 row stay f32 (VPU/EUP path).
    xb = x2d.astype(jnp.bfloat16)
    if B_pad != B:                       # only the small batch remainder is padded
        xb = jnp.pad(xb, ((0, B_pad - B), (0, 0)))
        if conditional:
            b1_eff = jnp.pad(b1_eff, ((0, B_pad - B), (0, 0)))

    w1b = w1_x.astype(jnp.bfloat16)
    w2b = w2.astype(jnp.bfloat16)
    w3b = w3.astype(jnp.bfloat16)
    w4_row = w4.reshape(1, -1).astype(jnp.float32)                   # (1, H//2)
    b4_2d = b4.reshape(1, 1).astype(jnp.float32)

    def const_spec(a):   # full array, resident in VMEM across all grid steps
        return pl.BlockSpec(a.shape, lambda i: (0, 0),
                            memory_space=pltpu.MemorySpace.VMEM)

    if conditional:
        b1_spec = pl.BlockSpec((TM, H), lambda i: (i, 0),
                               memory_space=pltpu.MemorySpace.VMEM)
    else:
        b1_spec = const_spec(b1_eff)

    # Scoped-VMEM estimate (double-buffered) -> only set an explicit limit when big.
    b1_buf = TM * H if conditional else H
    vmem_need = (2 * TM * K * 2                  # x tile (bf16)
                 + 2 * TM * OUT_W * 4            # output tile (f32)
                 + 2 * b1_buf * 4                # b1 (streamed or constant)
                 + 2 * (w1b.size + w2b.size + w3b.size) * 2
                 + 2 * (b2.size + b3.size + w4_row.size + b4_2d.size) * 4)
    cp_kwargs = dict(dimension_semantics=("parallel",))
    if vmem_need > (12 << 20):
        cp_kwargs["vmem_limit_bytes"] = int(min(vmem_need + (8 << 20), 56 << 20))

    out = pl.pallas_call(
        _disc_kernel,
        out_shape=jax.ShapeDtypeStruct((B_pad, OUT_W), jnp.float32),
        grid=(B_pad // TM,),
        in_specs=[
            pl.BlockSpec((TM, K), lambda i: (i, 0),
                         memory_space=pltpu.MemorySpace.VMEM),
            const_spec(w1b), b1_spec,
            const_spec(w2b), const_spec(b2),
            const_spec(w3b), const_spec(b3),
            const_spec(w4_row), const_spec(b4_2d),
        ],
        out_specs=pl.BlockSpec((TM, OUT_W), lambda i: (i, 0),
                               memory_space=pltpu.MemorySpace.VMEM),
        compiler_params=pltpu.CompilerParams(**cp_kwargs),
    )(xb, w1b, b1_eff, w2b, b2, w3b, b3, w4_row, b4_2d)

    # Strip batch-remainder padding and take the real probability column.
    return out[:B, :1]


def init_params(key, input_size, hidden_size, num_classes=0):
    """Deterministic init mimicking nn.Linear default (U(-1/sqrt(fan_in), ...)).
    Weights stored as [in, out] (transposed vs. PyTorch's [out, in])."""
    dims = [
        (input_size + num_classes, hidden_size),   # fc1
        (hidden_size, hidden_size),                # fc2
        (hidden_size, hidden_size // 2),           # fc3
        (hidden_size // 2, 1),                     # fc4
    ]
    params = {}
    names = ["fc1", "fc2", "fc3", "fc4"]
    for name, (fan_in, fan_out) in zip(names, dims):
        key, kw, kb = jax.random.split(key, 3)
        bound = 1.0 / jnp.sqrt(jnp.float32(fan_in))
        w = jax.random.uniform(kw, (fan_in, fan_out), jnp.float32, -bound, bound)
        b = jax.random.uniform(kb, (1, fan_out), jnp.float32, -bound, bound)
        params[name] = (w, b)
    return params


def _reference(x2d, params):
    """Pure-JAX f32 reference matching the PyTorch module."""
    h = x2d
    for name in ["fc1", "fc2", "fc3"]:
        w, b = params[name]
        h = h @ w + b
        h = jnp.where(h > 0, h, 0.1 * h)
    w, b = params["fc4"]
    return jax.nn.sigmoid(h @ w + b)


if __name__ == "__main__":
    key = jax.random.PRNGKey(0)

    # Small shapes consistent with the module: x is an image batch, flattened.
    B, C, H, W = 8, 1, 16, 16          # input_size = C*H*W = 256
    hidden_size = 128
    input_size = C * H * W

    key, kx, kp, ky, kpc = jax.random.split(key, 5)
    x = jax.random.normal(kx, (B, C, H, W), jnp.float32)

    # --- unconditional path ---
    params = init_params(kp, input_size, hidden_size, num_classes=0)
    out = discriminator_forward(x, params, conditional=False)
    out = jax.block_until_ready(out)

    expected = _reference(x.reshape(B, -1), params)
    assert out.shape == (B, 1)
    # bf16 matmul inputs + approx reciprocal loosen tolerance vs the f32 reference.
    assert jnp.allclose(out, expected, atol=2e-2, rtol=2e-2), (
        jnp.max(jnp.abs(out - expected)))

    # --- conditional path (class handled as a gathered fc1-weight row, no concat) ---
    num_classes = 10
    params_c = init_params(kpc, input_size, hidden_size, num_classes=num_classes)
    y = jax.random.randint(ky, (B,), 0, num_classes)
    out_c = discriminator_forward(x, params_c, conditional=True, y=y,
                                  num_classes=num_classes)
    out_c = jax.block_until_ready(out_c)

    y_oh = jax.nn.one_hot(y, num_classes, dtype=jnp.float32)
    x2d_c = jnp.concatenate([x.reshape(B, -1), y_oh], axis=-1)
    expected_c = _reference(x2d_c, params_c)
    assert out_c.shape == (B, 1)
    assert jnp.allclose(out_c, expected_c, atol=2e-2, rtol=2e-2), (
        jnp.max(jnp.abs(out_c - expected_c)))

    print("KERNEL_OK")
</pallas_src>

<mosaic_0001>
module attributes {stable_mosaic.version = 11 : i64} {
  func.func @_disc_kernel(%arg0: i32, %arg1: memref<16x256xbf16, #tpu.memory_space<vmem>>, %arg2: memref<256x128xbf16, #tpu.memory_space<vmem>>, %arg3: memref<1x128xf32, #tpu.memory_space<vmem>>, %arg4: memref<128x128xbf16, #tpu.memory_space<vmem>>, %arg5: memref<1x128xf32, #tpu.memory_space<vmem>>, %arg6: memref<128x64xbf16, #tpu.memory_space<vmem>>, %arg7: memref<1x64xf32, #tpu.memory_space<vmem>>, %arg8: memref<1x64xf32, #tpu.memory_space<vmem>>, %arg9: memref<1x1xf32, #tpu.memory_space<vmem>>, %arg10: memref<16x8xf32, #tpu.memory_space<vmem>>) attributes {dimension_semantics = [#tpu.dimension_semantics<parallel>], iteration_bounds = array<i64: 1>, scalar_prefetch = 0 : i64, scratch_operands = 0 : i64, tpu.core_type = #tpu.core_type<tc>, window_params = [{transform_indices = @transform_0, window_bounds = array<i64: 16, 256>}, {pipeline_mode = #tpu.pipeline_mode<synchronous>, transform_indices = @transform_1, window_bounds = array<i64: 256, 128>}, {pipeline_mode = #tpu.pipeline_mode<synchronous>, transform_indices = @transform_2, window_bounds = array<i64: 1, 128>}, {pipeline_mode = #tpu.pipeline_mode<synchronous>, transform_indices = @transform_3, window_bounds = array<i64: 128, 128>}, {pipeline_mode = #tpu.pipeline_mode<synchronous>, transform_indices = @transform_4, window_bounds = array<i64: 1, 128>}, {pipeline_mode = #tpu.pipeline_mode<synchronous>, transform_indices = @transform_5, window_bounds = array<i64: 128, 64>}, {pipeline_mode = #tpu.pipeline_mode<synchronous>, transform_indices = @transform_6, window_bounds = array<i64: 1, 64>}, {pipeline_mode = #tpu.pipeline_mode<synchronous>, transform_indices = @transform_7, window_bounds = array<i64: 1, 64>}, {pipeline_mode = #tpu.pipeline_mode<synchronous>, transform_indices = @transform_8, window_bounds = array<i64: 1, 1>}, {transform_indices = @transform_9, window_bounds = array<i64: 16, 8>}]} {
    %c0 = arith.constant 0 : index
    %c0_0 = arith.constant 0 : index
    %0 = vector.load %arg1[%c0, %c0_0] : memref<16x256xbf16, #tpu.memory_space<vmem>>, vector<16x256xbf16>
    %c0_1 = arith.constant 0 : index
    %c0_2 = arith.constant 0 : index
    %1 = vector.load %arg2[%c0_1, %c0_2] : memref<256x128xbf16, #tpu.memory_space<vmem>>, vector<256x128xbf16>
    %cst = arith.constant dense<0.000000e+00> : vector<16x128xf32>
    %2 = tpu.matmul %0, %1, %cst {dimension_numbers = #tpu.dot_dimension_numbers<[1], [0], [0], [1], [0, 0, 1, 1], [], []>} : vector<16x256xbf16>, vector<256x128xbf16>, vector<16x128xf32> -> vector<16x128xf32>
    %c0_3 = arith.constant 0 : index
    %c0_4 = arith.constant 0 : index
    %3 = vector.load %arg3[%c0_3, %c0_4] : memref<1x128xf32, #tpu.memory_space<vmem>>, vector<1x128xf32>
    %4 = vector.broadcast %3 : vector<1x128xf32> to vector<16x128xf32>
    %5 = arith.addf %2, %4 : vector<16x128xf32>
    %cst_5 = arith.constant 0.000000e+00 : f32
    %6 = vector.broadcast %cst_5 : f32 to vector<16x128xf32>
    %7 = arith.cmpf ogt, %5, %6 : vector<16x128xf32>
    %cst_6 = arith.constant 1.000000e-01 : f32
    %8 = vector.broadcast %cst_6 : f32 to vector<16x128xf32>
    %9 = arith.mulf %8, %5 : vector<16x128xf32>
    %10 = arith.select %7, %5, %9 : vector<16x128xi1>, vector<16x128xf32>
    %11 = arith.truncf %10 : vector<16x128xf32> to vector<16x128xbf16>
    %c0_7 = arith.constant 0 : index
    %c0_8 = arith.constant 0 : index
    %12 = vector.load %arg4[%c0_7, %c0_8] : memref<128x128xbf16, #tpu.memory_space<vmem>>, vector<128x128xbf16>
    %cst_9 = arith.constant dense<0.000000e+00> : vector<16x128xf32>
    %13 = tpu.matmul %11, %12, %cst_9 {dimension_numbers = #tpu.dot_dimension_numbers<[1], [0], [0], [1], [0, 0, 1, 1], [], []>} : vector<16x128xbf16>, vector<128x128xbf16>, vector<16x128xf32> -> vector<16x128xf32>
    %c0_10 = arith.constant 0 : index
    %c0_11 = arith.constant 0 : index
    %14 = vector.load %arg5[%c0_10, %c0_11] : memref<1x128xf32, #tpu.memory_space<vmem>>, vector<1x128xf32>
    %15 = vector.broadcast %14 : vector<1x128xf32> to vector<16x128xf32>
    %16 = arith.addf %13, %15 : vector<16x128xf32>
    %cst_12 = arith.constant 0.000000e+00 : f32
    %17 = vector.broadcast %cst_12 : f32 to vector<16x128xf32>
    %18 = arith.cmpf ogt, %16, %17 : vector<16x128xf32>
    %cst_13 = arith.constant 1.000000e-01 : f32
    %19 = vector.broadcast %cst_13 : f32 to vector<16x128xf32>
    %20 = arith.mulf %19, %16 : vector<16x128xf32>
    %21 = arith.select %18, %16, %20 : vector<16x128xi1>, vector<16x128xf32>
    %22 = arith.truncf %21 : vector<16x128xf32> to vector<16x128xbf16>
    %c0_14 = arith.constant 0 : index
    %c0_15 = arith.constant 0 : index
    %23 = vector.load %arg6[%c0_14, %c0_15] : memref<128x64xbf16, #tpu.memory_space<vmem>>, vector<128x64xbf16>
    %cst_16 = arith.constant dense<0.000000e+00> : vector<16x64xf32>
    %24 = tpu.matmul %22, %23, %cst_16 {dimension_numbers = #tpu.dot_dimension_numbers<[1], [0], [0], [1], [0, 0, 1, 1], [], []>} : vector<16x128xbf16>, vector<128x64xbf16>, vector<16x64xf32> -> vector<16x64xf32>
    %c0_17 = arith.constant 0 : index
    %c0_18 = arith.constant 0 : index
    %25 = vector.load %arg7[%c0_17, %c0_18] : memref<1x64xf32, #tpu.memory_space<vmem>>, vector<1x64xf32>
    %26 = vector.broadcast %25 : vector<1x64xf32> to vector<16x64xf32>
    %27 = arith.addf %24, %26 : vector<16x64xf32>
    %cst_19 = arith.constant 0.000000e+00 : f32
    %28 = vector.broadcast %cst_19 : f32 to vector<16x64xf32>
    %29 = arith.cmpf ogt, %27, %28 : vector<16x64xf32>
    %cst_20 = arith.constant 1.000000e-01 : f32
    %30 = vector.broadcast %cst_20 : f32 to vector<16x64xf32>
    %31 = arith.mulf %30, %27 : vector<16x64xf32>
    %32 = arith.select %29, %27, %31 : vector<16x64xi1>, vector<16x64xf32>
    %c0_21 = arith.constant 0 : index
    %c0_22 = arith.constant 0 : index
    %33 = vector.load %arg8[%c0_21, %c0_22] : memref<1x64xf32, #tpu.memory_space<vmem>>, vector<1x64xf32>
    %34 = vector.broadcast %33 : vector<1x64xf32> to vector<16x64xf32>
    %35 = arith.mulf %32, %34 : vector<16x64xf32>
    %cst_23 = arith.constant dense<0.000000e+00> : vector<16xf32>
    %36 = vector.multi_reduction <add>, %35, %cst_23 [1] : vector<16x64xf32> to vector<16xf32>
    %37 = vector.shape_cast %36 : vector<16xf32> to vector<16x1xf32>
    %c0_24 = arith.constant 0 : index
    %c0_25 = arith.constant 0 : index
    %38 = vector.load %arg9[%c0_24, %c0_25] : memref<1x1xf32, #tpu.memory_space<vmem>>, vector<1x1xf32>
    %39 = vector.broadcast %38 : vector<1x1xf32> to vector<16x1xf32>
    %40 = arith.addf %37, %39 : vector<16x1xf32>
    %cst_26 = arith.constant 0.000000e+00 : f32
    %41 = vector.broadcast %cst_26 : f32 to vector<16x1xf32>
    %42 = arith.subf %41, %40 : vector<16x1xf32>
    %43 = math.exp %42 : vector<16x1xf32>
    %cst_27 = arith.constant 1.000000e+00 : f32
    %44 = vector.broadcast %cst_27 : f32 to vector<16x1xf32>
    %45 = arith.addf %44, %43 : vector<16x1xf32>
    %46 = tpu.reciprocal %45 {approx = true} : vector<16x1xf32> -> vector<16x1xf32>
    %cst_28 = arith.constant 0.000000e+00 : f32
    %cst_29 = arith.constant 1.000000e+00 : f32
    %47 = vector.broadcast %cst_28 : f32 to vector<16x1xf32>
    %48 = arith.maximumf %47, %46 : vector<16x1xf32>
    %49 = vector.broadcast %cst_29 : f32 to vector<16x1xf32>
    %50 = arith.minimumf %49, %48 : vector<16x1xf32>
    %51 = vector.shape_cast %50 : vector<16x1xf32> to vector<16x1xf32>
    %52 = vector.broadcast %51 : vector<16x1xf32> to vector<16x8xf32>
    %c0_30 = arith.constant 0 : index
    %c0_31 = arith.constant 0 : index
    %53 = vector.load %arg10[%c0_30, %c0_31] : memref<16x8xf32, #tpu.memory_space<vmem>>, vector<16x8xf32>
    tpu.vector_store %arg10[%c0_30, %c0_31], %52 {strides = array<i32>} : memref<16x8xf32, #tpu.memory_space<vmem>>, vector<16x8xf32>,
    return
  }
  func.func @transform_0(%arg0: i32) -> (i32, i32) {
    %c0_i32 = arith.constant 0 : i32
    %c0_i32_0 = arith.constant 0 : i32
    return %arg0, %c0_i32 : i32, i32
  }
  func.func @transform_1(%arg0: i32) -> (i32, i32) {
    %c0_i32 = arith.constant 0 : i32
    %c0_i32_0 = arith.constant 0 : i32
    %c0_i32_1 = arith.constant 0 : i32
    return %c0_i32, %c0_i32_0 : i32, i32
  }
  func.func @transform_2(%arg0: i32) -> (i32, i32) {
    %c0_i32 = arith.constant 0 : i32
    %c0_i32_0 = arith.constant 0 : i32
    %c0_i32_1 = arith.constant 0 : i32
    return %c0_i32, %c0_i32_0 : i32, i32
  }
  func.func @transform_3(%arg0: i32) -> (i32, i32) {
    %c0_i32 = arith.constant 0 : i32
    %c0_i32_0 = arith.constant 0 : i32
    %c0_i32_1 = arith.constant 0 : i32
    return %c0_i32, %c0_i32_0 : i32, i32
  }
  func.func @transform_4(%arg0: i32) -> (i32, i32) {
    %c0_i32 = arith.constant 0 : i32
    %c0_i32_0 = arith.constant 0 : i32
    %c0_i32_1 = arith.constant 0 : i32
    return %c0_i32, %c0_i32_0 : i32, i32
  }
  func.func @transform_5(%arg0: i32) -> (i32, i32) {
    %c0_i32 = arith.constant 0 : i32
    %c0_i32_0 = arith.constant 0 : i32
    %c0_i32_1 = arith.constant 0 : i32
    return %c0_i32, %c0_i32_0 : i32, i32
  }
  func.func @transform_6(%arg0: i32) -> (i32, i32) {
    %c0_i32 = arith.constant 0 : i32
    %c0_i32_0 = arith.constant 0 : i32
    %c0_i32_1 = arith.constant 0 : i32
    return %c0_i32, %c0_i32_0 : i32, i32
  }
  func.func @transform_7(%arg0: i32) -> (i32, i32) {
    %c0_i32 = arith.constant 0 : i32
    %c0_i32_0 = arith.constant 0 : i32
    %c0_i32_1 = arith.constant 0 : i32
    return %c0_i32, %c0_i32_0 : i32, i32
  }
  func.func @transform_8(%arg0: i32) -> (i32, i32) {
    %c0_i32 = arith.constant 0 : i32
    %c0_i32_0 = arith.constant 0 : i32
    %c0_i32_1 = arith.constant 0 : i32
    return %c0_i32, %c0_i32_0 : i32, i32
  }
  func.func @transform_9(%arg0: i32) -> (i32, i32) {
    %c0_i32 = arith.constant 0 : i32
    %c0_i32_0 = arith.constant 0 : i32
    return %arg0, %c0_i32 : i32, i32
  }
}

</mosaic_0001>

<llo_original>
// kernel: tpu_custom_call.1
$region0: #{tpu_custom_call.1}
  #allocation0 [shape = 'u32[]', space=smem, size = 0x4, offset = 0x4, fixed_abs, tag = 'smem constant byte address 0x4 - core index']
  #allocation1 [shape = 'u32[144,128]{1,0:T(1,128)}', space=vmem, size = 0x12000, scoped, tag = 'internal scratch']
  #allocation2 [shape = 'f32[1,1]{1,0:T(1,128)S(1)}', space=vmem, size = 0x200, scoped, tag = 'scoped memory for tpu_custom_call.1']
  %s0 = inlined_call_operand.vmem [shape: bf16[16,256], index: 0, kind: input, shape index: {}]
  %s1 = inlined_call_operand.hbm [shape: bf16[256,128], index: 1, kind: input, shape index: {}]
  %s2 = inlined_call_operand.vmem [shape: f32[1,128], index: 2, kind: input, shape index: {}]
  %s3 = inlined_call_operand.vmem [shape: bf16[128,128], index: 3, kind: input, shape index: {}]
  %s4 = inlined_call_operand.vmem [shape: f32[1,128], index: 4, kind: input, shape index: {}]
  %s5 = inlined_call_operand.vmem [shape: bf16[128,64], index: 5, kind: input, shape index: {}]
  %s6 = inlined_call_operand.vmem [shape: f32[1,64], index: 6, kind: input, shape index: {}]
  %s7 = inlined_call_operand.vmem [shape: f32[1,64], index: 7, kind: input, shape index: {}]
  %s8 = inlined_call_operand.<no memory space> [shape: f32[1,1], index: 8, kind: input, shape index: {}]
  %s9 = inlined_call_operand.vmem [shape: f32[16,8], index: 9, kind: output, shape index: {}]
  %s10 = sld [smem:[#allocation0]]
  $region50: #{tpu_custom_call.1} parent=0
    _
  %s12 = ssub.s32 1, %s10
  %s13 = scalar_select 0, %s12, %s10
  %v14 = vstv %s8
  %15 = vst [vmem:[#allocation2] sm:$0x1] %v14
  $region1: #{tpu_custom_call.1} parent=0
    #allocation3 [shape = 'u8[65536]{0}', space=vmem, size = 0x10000, scoped, tag = 'input window, operand 1, single buffered']
    #allocation4 [shape = 's32[1]{0}', space=sflag, size = 0x4, scoped, tag = 'scoped memory for tpu_custom_call.1']
    %16 = vsyncpa [#allocation4], 0
    // Predicated region
    $region2: #{tpu_custom_call.1} parent=1 // pred_check
      _
    $region3: #{tpu_custom_call.1} parent=1 // pred_check_branch
      %18 = sbr.rel (0) target = $region5
    $region4: #{tpu_custom_call.1} parent=1 // pred_region
      _
    $region5: #{tpu_custom_call.1} parent=1 // pred_fallthru
      _
    // Predicated region
    $region6: #{tpu_custom_call.1} parent=1 // pred_check
      _
    $region7: #{tpu_custom_call.1} parent=1 // pred_check_branch
      %20 = sbr.rel (0) target = $region9
    $region8: #{tpu_custom_call.1} parent=1 // pred_region
      %s22 = ssub.s32 2048, 2048
      %23 = vsyncadd [#allocation4], %s22
      %s24 = sshll.u32 [#allocation3], 4
      %s25 = int_to_ptr.vmem [resolvable:$true] %s24
      %30 = dma.hbm_to_vmem [thread:$0]  %s1, 2048, %s25, [#allocation4], 64, 64, 4
    $region9: #{tpu_custom_call.1} parent=1 // pred_fallthru
      _
    // Predicated region
    $region10: #{tpu_custom_call.1} parent=1 // pred_check
      _
    $region11: #{tpu_custom_call.1} parent=1 // pred_check_branch
      %32 = sbr.rel (0) target = $region13
    $region12: #{tpu_custom_call.1} parent=1 // pred_region
      _
    $region13: #{tpu_custom_call.1} parent=1 // pred_fallthru
      _
    // Predicated region
    $region14: #{tpu_custom_call.1} parent=1 // pred_check
      _
    $region15: #{tpu_custom_call.1} parent=1 // pred_check_branch
      %34 = sbr.rel (0) target = $region17
    $region16: #{tpu_custom_call.1} parent=1 // pred_region
      _
    $region17: #{tpu_custom_call.1} parent=1 // pred_fallthru
      _
    // Predicated region
    $region18: #{tpu_custom_call.1} parent=1 // pred_check
      _
    $region19: #{tpu_custom_call.1} parent=1 // pred_check_branch
      %36 = sbr.rel (0) target = $region21
    $region20: #{tpu_custom_call.1} parent=1 // pred_region
      _
    $region21: #{tpu_custom_call.1} parent=1 // pred_fallthru
      _
    // Predicated region
    $region22: #{tpu_custom_call.1} parent=1 // pred_check
      _
    $region23: #{tpu_custom_call.1} parent=1 // pred_check_branch
      %38 = sbr.rel (0) target = $region25
    $region24: #{tpu_custom_call.1} parent=1 // pred_region
      _
    $region25: #{tpu_custom_call.1} parent=1 // pred_fallthru
      _
    // Predicated region
    $region26: #{tpu_custom_call.1} parent=1 // pred_check
      _
    $region27: #{tpu_custom_call.1} parent=1 // pred_check_branch
      %40 = sbr.rel (0) target = $region29
    $region28: #{tpu_custom_call.1} parent=1 // pred_region
      _
    $region29: #{tpu_custom_call.1} parent=1 // pred_fallthru
      _
    // Predicated region
    $region30: #{tpu_custom_call.1} parent=1 // pred_check
      _
    $region31: #{tpu_custom_call.1} parent=1 // pred_check_branch
      %42 = sbr.rel (0) target = $region33
    $region32: #{tpu_custom_call.1} parent=1 // pred_region
      _
    $region33: #{tpu_custom_call.1} parent=1 // pred_fallthru
      _
    // Predicated region
    $region34: #{tpu_custom_call.1} parent=1 // pred_check
      _
    $region35: #{tpu_custom_call.1} parent=1 // pred_check_branch
      %44 = sbr.rel (0) target = $region37
    $region36: #{tpu_custom_call.1} parent=1 // pred_region
      _
    $region37: #{tpu_custom_call.1} parent=1 // pred_fallthru
      _
    // Predicated region
    $region38: #{tpu_custom_call.1} parent=1 // pred_check
      _
    $region39: #{tpu_custom_call.1} parent=1 // pred_check_branch
      %46 = sbr.rel (0) target = $region41
    $region40: #{tpu_custom_call.1} parent=1 // pred_region
      %47 = dma.done [#allocation4], 2048
    $region41: #{tpu_custom_call.1} parent=1 // pred_fallthru
      _
    %v49 = vld [vmem:[%s0] sm:$0xff]
    %v50 = vld [vmem:[%s0 + $0x8] sm:$0xff]
    %v51 = vld [vmem:[#allocation3] sm:$0xf]
    %v52 = vld [vmem:[#allocation3 + $0x4] sm:$0xf]
    %v53 = vld [vmem:[#allocation3 + $0x8] sm:$0xf]
    %v54 = vld [vmem:[#allocation3 + $0xc] sm:$0xf]
    %v55 = vld [vmem:[#allocation3 + $0x10] sm:$0xf]
    %v56 = vld [vmem:[#allocation3 + $0x14] sm:$0xf]
    %v57 = vld [vmem:[#allocation3 + $0x18] sm:$0xf]
    %v58 = vld [vmem:[#allocation3 + $0x1c] sm:$0xf]
    %v59 = vld [vmem:[#allocation3 + $0x20] sm:$0xf]
    %v60 = vld [vmem:[#allocation3 + $0x24] sm:$0xf]
    %v61 = vld [vmem:[#allocation3 + $0x28] sm:$0xf]
    %v62 = vld [vmem:[#allocation3 + $0x2c] sm:$0xf]
    %v63 = vld [vmem:[#allocation3 + $0x30] sm:$0xf]
    %v64 = vld [vmem:[#allocation3 + $0x34] sm:$0xf]
    %v65 = vld [vmem:[#allocation3 + $0x38] sm:$0xf]
    %v66 = vld [vmem:[#allocation3 + $0x3c] sm:$0xf]
    %v67 = vld [vmem:[#allocation3 + $0x40] sm:$0xf]
    %v68 = vld [vmem:[#allocation3 + $0x44] sm:$0xf]
    %v69 = vld [vmem:[#allocation3 + $0x48] sm:$0xf]
    %v70 = vld [vmem:[#allocation3 + $0x4c] sm:$0xf]
    %v71 = vld [vmem:[#allocation3 + $0x50] sm:$0xf]
    %v72 = vld [vmem:[#allocation3 + $0x54] sm:$0xf]
    %v73 = vld [vmem:[#allocation3 + $0x58] sm:$0xf]
    %v74 = vld [vmem:[#allocation3 + $0x5c] sm:$0xf]
    %v75 = vld [vmem:[#allocation3 + $0x60] sm:$0xf]
    %v76 = vld [vmem:[#allocation3 + $0x64] sm:$0xf]
    %v77 = vld [vmem:[#allocation3 + $0x68] sm:$0xf]
    %v78 = vld [vmem:[#allocation3 + $0x6c] sm:$0xf]
    %v79 = vld [vmem:[#allocation3 + $0x70] sm:$0xf]
    %v80 = vld [vmem:[#allocation3 + $0x74] sm:$0xf]
    %v81 = vld [vmem:[#allocation3 + $0x78] sm:$0xf]
    %v82 = vld [vmem:[#allocation3 + $0x7c] sm:$0xf]
    %v83 = vld [vmem:[%s2] sm:$0x1]
    %v85 = vlaneseq
    %v86 = vshrl.u32 %v85, 7
    %v87 = vsub.s32 0, %v86
    %v88 = vrot.slane %v83, %v87
    %v92 = vunpack.c.l.b16 %v49
    %v93 = vunpack.c.h.b16 %v49
    %v94 = vunpack.c.l.b16 %v50
    %v95 = vunpack.c.h.b16 %v50
    %v96 = vpack.c.b16 %v94, %v92
    %v97 = vpack.c.b16 %v95, %v93
    %v132 = vunpack.c.l.b16 %v51
    %v133 = vunpack.c.l.b16 %v52
    %v134 = vunpack.c.l.b16 %v53
    %v135 = vunpack.c.l.b16 %v54
    %v136 = vunpack.c.l.b16 %v55
    %v137 = vunpack.c.l.b16 %v56
    %v138 = vunpack.c.l.b16 %v57
    %v139 = vunpack.c.l.b16 %v58
    %v140 = vunpack.c.l.b16 %v59
    %v141 = vunpack.c.l.b16 %v60
    %v142 = vunpack.c.l.b16 %v61
    %v143 = vunpack.c.l.b16 %v62
    %v144 = vunpack.c.l.b16 %v63
    %v145 = vunpack.c.l.b16 %v64
    %v146 = vunpack.c.l.b16 %v65
    %v147 = vunpack.c.l.b16 %v66
    %v148 = vunpack.c.l.b16 %v67
    %v149 = vunpack.c.l.b16 %v68
    %v150 = vunpack.c.l.b16 %v69
    %v151 = vunpack.c.l.b16 %v70
    %v152 = vunpack.c.l.b16 %v71
    %v153 = vunpack.c.l.b16 %v72
    %v154 = vunpack.c.l.b16 %v73
    %v155 = vunpack.c.l.b16 %v74
    %v156 = vunpack.c.l.b16 %v75
    %v157 = vunpack.c.l.b16 %v76
    %v158 = vunpack.c.l.b16 %v77
    %v159 = vunpack.c.l.b16 %v78
    %v160 = vunpack.c.l.b16 %v79
    %v161 = vunpack.c.l.b16 %v80
    %v162 = vunpack.c.l.b16 %v81
    %v163 = vunpack.c.l.b16 %v82
    %v164 = vpack.c.b16 %v133, %v132
    %v165 = vpack.c.b16 %v135, %v134
    %v166 = vpack.c.b16 %v137, %v136
    %v167 = vpack.c.b16 %v139, %v138
    %v168 = vpack.c.b16 %v141, %v140
    %v169 = vpack.c.b16 %v143, %v142
    %v170 = vpack.c.b16 %v145, %v144
    %v171 = vpack.c.b16 %v147, %v146
    %v172 = vpack.c.b16 %v149, %v148
    %v173 = vpack.c.b16 %v151, %v150
    %v174 = vpack.c.b16 %v153, %v152
    %v175 = vpack.c.b16 %v155, %v154
    %v176 = vpack.c.b16 %v157, %v156
    %v177 = vpack.c.b16 %v159, %v158
    %v178 = vpack.c.b16 %v161, %v160
    %v179 = vpack.c.b16 %v163, %v162
    %196 = vmatprep.subr.bf16.mxu0 0
    %197 = vmatpush1.bf16.msra.mxu0 %v171
    %198 = vmatprep.subr.bf16.mxu0 0
    %199 = vmatpush1.bf16.msra.mxu0 %v170
    %200 = vmatprep.subr.bf16.mxu0 0
    %201 = vmatpush1.bf16.msra.mxu0 %v169
    %202 = vmatprep.subr.bf16.mxu0 0
    %203 = vmatpush1.bf16.msra.mxu0 %v168
    %204 = vmatprep.subr.bf16.mxu0 0
    %205 = vmatpush1.bf16.msra.mxu0 %v167
    %206 = vmatprep.subr.bf16.mxu0 0
    %207 = vmatpush1.bf16.msra.mxu0 %v166
    %208 = vmatprep.subr.bf16.mxu0 0
    %209 = vmatpush1.bf16.msra.mxu0 %v165
    %210 = vmatprep.subr.bf16.mxu0 0
    %211 = vmatpush1.bf16.msra.mxu0 %v164
    %212 = vmatprep.subr.bf16.mxu0 0
    %213 = vmatpush2.bf16.msra.mxu0 %v179
    %214 = vmatprep.subr.bf16.mxu0 0
    %215 = vmatpush2.bf16.msra.mxu0 %v178
    %216 = vmatprep.subr.bf16.mxu0 0
    %217 = vmatpush2.bf16.msra.mxu0 %v177
    %218 = vmatprep.subr.bf16.mxu0 0
    %219 = vmatpush2.bf16.msra.mxu0 %v176
    %220 = vmatprep.subr.bf16.mxu0 0
    %221 = vmatpush2.bf16.msra.mxu0 %v175
    %222 = vmatprep.subr.bf16.mxu0 0
    %223 = vmatpush2.bf16.msra.mxu0 %v174
    %224 = vmatprep.subr.bf16.mxu0 0
    %225 = vmatpush2.bf16.msra.mxu0 %v173
    %226 = vmatprep.subr.bf16.mxu0 0
    %227 = vmatpush2.bf16.msra.mxu0 %v172
    %228 = vmatprep.mubr.bf16.mxu0 %v97
    %229 = vmatmul.mubr.bf16.gmra.mxu0 %v96
    %v230 = vpop.f32.mrf.mxu0
    %v231 = vadd.f32 %v88, %v230
    %v232 = vpop.f32.mrf.mxu0
    %v233 = vpop.f32.mrf.mxu0
    %v234 = vadd.f32 %v88, %v233
    %v235 = vpop.f32.mrf.mxu0
    %236 = vdwg.mxu0
    %vm237 = vcmp.gt.f32.partialorder %v231, 0.0
    %vm238 = vcmp.gt.f32.partialorder %v234, 0.0
    %v239 = vmul.f32 %v231, 0.1
    %v240 = vmul.f32 %v234, 0.1
    %v241 = vsel %vm237, %v231, %v239
    %v242 = vsel %vm238, %v234, %v240
    %v243 = vpack.c.bf16 %v242, %v241
    %v244 = vld [vmem:[%s3] sm:$0xf]
    %v245 = vld [vmem:[%s3 + $0x4] sm:$0xf]
    %v246 = vld [vmem:[%s3 + $0x8] sm:$0xf]
    %v247 = vld [vmem:[%s3 + $0xc] sm:$0xf]
    %v248 = vld [vmem:[%s3 + $0x10] sm:$0xf]
    %v249 = vld [vmem:[%s3 + $0x14] sm:$0xf]
    %v250 = vld [vmem:[%s3 + $0x18] sm:$0xf]
    %v251 = vld [vmem:[%s3 + $0x1c] sm:$0xf]
    %v252 = vld [vmem:[%s3 + $0x20] sm:$0xf]
    %v253 = vld [vmem:[%s3 + $0x24] sm:$0xf]
    %v254 = vld [vmem:[%s3 + $0x28] sm:$0xf]
    %v255 = vld [vmem:[%s3 + $0x2c] sm:$0xf]
    %v256 = vld [vmem:[%s3 + $0x30] sm:$0xf]
    %v257 = vld [vmem:[%s3 + $0x34] sm:$0xf]
    %v258 = vld [vmem:[%s3 + $0x38] sm:$0xf]
    %v259 = vld [vmem:[%s3 + $0x3c] sm:$0xf]
    %v260 = vld [vmem:[%s4] sm:$0x1]
    %v262 = vlaneseq
    %v263 = vshrl.u32 %v262, 7
    %v264 = vsub.s32 0, %v263
    %v265 = vrot.slane %v260, %v264
    %v283 = vunpack.c.l.b16 %v244
    %v284 = vunpack.c.l.b16 %v245
    %v285 = vunpack.c.l.b16 %v246
    %v286 = vunpack.c.l.b16 %v247
    %v287 = vunpack.c.l.b16 %v248
    %v288 = vunpack.c.l.b16 %v249
    %v289 = vunpack.c.l.b16 %v250
    %v290 = vunpack.c.l.b16 %v251
    %v291 = vunpack.c.l.b16 %v252
    %v292 = vunpack.c.l.b16 %v253
    %v293 = vunpack.c.l.b16 %v254
    %v294 = vunpack.c.l.b16 %v255
    %v295 = vunpack.c.l.b16 %v256
    %v296 = vunpack.c.l.b16 %v257
    %v297 = vunpack.c.l.b16 %v258
    %v298 = vunpack.c.l.b16 %v259
    %v299 = vpack.c.b16 %v284, %v283
    %v300 = vpack.c.b16 %v286, %v285
    %v301 = vpack.c.b16 %v288, %v287
    %v302 = vpack.c.b16 %v290, %v289
    %v303 = vpack.c.b16 %v292, %v291
    %v304 = vpack.c.b16 %v294, %v293
    %v305 = vpack.c.b16 %v296, %v295
    %v306 = vpack.c.b16 %v298, %v297
    %315 = vmatprep.subr.bf16.mxu0 0
    %316 = vmatpush1.bf16.msra.mxu0 %v306
    %317 = vmatprep.subr.bf16.mxu0 0
    %318 = vmatpush1.bf16.msra.mxu0 %v305
    %319 = vmatprep.subr.bf16.mxu0 0
    %320 = vmatpush1.bf16.msra.mxu0 %v304
    %321 = vmatprep.subr.bf16.mxu0 0
    %322 = vmatpush1.bf16.msra.mxu0 %v303
    %323 = vmatprep.subr.bf16.mxu0 0
    %324 = vmatpush1.bf16.msra.mxu0 %v302
    %325 = vmatprep.subr.bf16.mxu0 0
    %326 = vmatpush1.bf16.msra.mxu0 %v301
    %327 = vmatprep.subr.bf16.mxu0 0
    %328 = vmatpush1.bf16.msra.mxu0 %v300
    %329 = vmatprep.subr.bf16.mxu0 0
    %330 = vmatpush1.bf16.msra.mxu0 %v299
    %331 = vmatprep.subr.bf16.mxu0 0
    %332 = vmatpush2.bf16.msra.mxu0 0
    %333 = vmatprep.subr.bf16.mxu0 0
    %334 = vmatpush2.bf16.msra.mxu0 0
    %335 = vmatprep.subr.bf16.mxu0 0
    %336 = vmatpush2.bf16.msra.mxu0 0
    %337 = vmatprep.subr.bf16.mxu0 0
    %338 = vmatpush2.bf16.msra.mxu0 0
    %339 = vmatprep.subr.bf16.mxu0 0
    %340 = vmatpush2.bf16.msra.mxu0 0
    %341 = vmatprep.subr.bf16.mxu0 0
    %342 = vmatpush2.bf16.msra.mxu0 0
    %343 = vmatprep.subr.bf16.mxu0 0
    %344 = vmatpush2.bf16.msra.mxu0 0
    %345 = vmatprep.subr.bf16.mxu0 0
    %346 = vmatpush2.bf16.msra.mxu0 0
    %347 = vmatprep.mubr.bf16.mxu0 0
    %348 = vmatmul.mubr.bf16.gmra.mxu0 %v243
    %v349 = vpop.f32.mrf.mxu0
    %v350 = vadd.f32 %v265, %v349
    %v351 = vpop.f32.mrf.mxu0
    %v352 = vpop.f32.mrf.mxu0
    %v353 = vadd.f32 %v265, %v352
    %v354 = vpop.f32.mrf.mxu0
    %355 = vdwg.mxu0
    %vm356 = vcmp.gt.f32.partialorder %v350, 0.0
    %vm357 = vcmp.gt.f32.partialorder %v353, 0.0
    %v358 = vmul.f32 %v350, 0.1
    %v359 = vmul.f32 %v353, 0.1
    %v360 = vsel %vm356, %v350, %v358
    %v361 = vsel %vm357, %v353, %v359
    %v362 = vpack.c.bf16 %v361, %v360
    %v363 = vld [vmem:[%s5] sm:$0xf]
    %v364 = vld [vmem:[%s5 + $0x4] sm:$0xf]
    %v365 = vld [vmem:[%s5 + $0x8] sm:$0xf]
    %v366 = vld [vmem:[%s5 + $0xc] sm:$0xf]
    %v367 = vld [vmem:[%s5 + $0x10] sm:$0xf]
    %v368 = vld [vmem:[%s5 + $0x14] sm:$0xf]
    %v369 = vld [vmem:[%s5 + $0x18] sm:$0xf]
    %v370 = vld [vmem:[%s5 + $0x1c] sm:$0xf]
    %v371 = vld [vmem:[%s5 + $0x20] sm:$0xf]
    %v372 = vld [vmem:[%s5 + $0x24] sm:$0xf]
    %v373 = vld [vmem:[%s5 + $0x28] sm:$0xf]
    %v374 = vld [vmem:[%s5 + $0x2c] sm:$0xf]
    %v375 = vld [vmem:[%s5 + $0x30] sm:$0xf]
    %v376 = vld [vmem:[%s5 + $0x34] sm:$0xf]
    %v377 = vld [vmem:[%s5 + $0x38] sm:$0xf]
    %v378 = vld [vmem:[%s5 + $0x3c] sm:$0xf]
    %v379 = vld [vmem:[%s6] sm:$0x1]
    %v381 = vlaneseq
    %v382 = vshrl.u32 %v381, 7
    %v383 = vsub.s32 0, %v382
    %v384 = vrot.slane %v379, %v383
    %v402 = vunpack.c.l.b16 %v363
    %v403 = vunpack.c.l.b16 %v364
    %v404 = vunpack.c.l.b16 %v365
    %v405 = vunpack.c.l.b16 %v366
    %v406 = vunpack.c.l.b16 %v367
    %v407 = vunpack.c.l.b16 %v368
    %v408 = vunpack.c.l.b16 %v369
    %v409 = vunpack.c.l.b16 %v370
    %v410 = vunpack.c.l.b16 %v371
    %v411 = vunpack.c.l.b16 %v372
    %v412 = vunpack.c.l.b16 %v373
    %v413 = vunpack.c.l.b16 %v374
    %v414 = vunpack.c.l.b16 %v375
    %v415 = vunpack.c.l.b16 %v376
    %v416 = vunpack.c.l.b16 %v377
    %v417 = vunpack.c.l.b16 %v378
    %v418 = vpack.c.b16 %v403, %v402
    %v419 = vpack.c.b16 %v405, %v404
    %v420 = vpack.c.b16 %v407, %v406
    %v421 = vpack.c.b16 %v409, %v408
    %v422 = vpack.c.b16 %v411, %v410
    %v423 = vpack.c.b16 %v413, %v412
    %v424 = vpack.c.b16 %v415, %v414
    %v425 = vpack.c.b16 %v417, %v416
    %434 = vmatprep.subr.bf16.mxu0 0
    %435 = vmatpush1.bf16.msra.mxu0 %v425
    %436 = vmatprep.subr.bf16.mxu0 0
    %437 = vmatpush1.bf16.msra.mxu0 %v424
    %438 = vmatprep.subr.bf16.mxu0 0
    %439 = vmatpush1.bf16.msra.mxu0 %v423
    %440 = vmatprep.subr.bf16.mxu0 0
    %441 = vmatpush1.bf16.msra.mxu0 %v422
    %442 = vmatprep.subr.bf16.mxu0 0
    %443 = vmatpush1.bf16.msra.mxu0 %v421
    %444 = vmatprep.subr.bf16.mxu0 0
    %445 = vmatpush1.bf16.msra.mxu0 %v420
    %446 = vmatprep.subr.bf16.mxu0 0
    %447 = vmatpush1.bf16.msra.mxu0 %v419
    %448 = vmatprep.subr.bf16.mxu0 0
    %449 = vmatpush1.bf16.msra.mxu0 %v418
    %450 = vmatprep.subr.bf16.mxu0 0
    %451 = vmatpush2.bf16.msra.mxu0 0
    %452 = vmatprep.subr.bf16.mxu0 0
    %453 = vmatpush2.bf16.msra.mxu0 0
    %454 = vmatprep.subr.bf16.mxu0 0
    %455 = vmatpush2.bf16.msra.mxu0 0
    %456 = vmatprep.subr.bf16.mxu0 0
    %457 = vmatpush2.bf16.msra.mxu0 0
    %458 = vmatprep.subr.bf16.mxu0 0
    %459 = vmatpush2.bf16.msra.mxu0 0
    %460 = vmatprep.subr.bf16.mxu0 0
    %461 = vmatpush2.bf16.msra.mxu0 0
    %462 = vmatprep.subr.bf16.mxu0 0
    %463 = vmatpush2.bf16.msra.mxu0 0
    %464 = vmatprep.subr.bf16.mxu0 0
    %465 = vmatpush2.bf16.msra.mxu0 0
    %466 = vmatprep.mubr.bf16.mxu0 0
    %467 = vmatmul.mubr.bf16.gmra.mxu0 %v362
    %v468 = vpop.f32.mrf.mxu0
    %v469 = vadd.f32 %v384, %v468
    %v470 = vpop.f32.mrf.mxu0
    %v471 = vpop.f32.mrf.mxu0
    %v472 = vadd.f32 %v384, %v471
    %v473 = vpop.f32.mrf.mxu0
    %474 = vdwg.mxu0
    %vm475 = vcmp.gt.f32.partialorder %v469, 0.0
    %vm476 = vcmp.gt.f32.partialorder %v472, 0.0
    %v477 = vmul.f32 %v469, 0.1
    %v478 = vmul.f32 %v472, 0.1
    %v479 = vsel %vm475, %v469, %v477
    %v480 = vsel %vm476, %v472, %v478
    %v481 = vld [vmem:[%s7] sm:$0x1]
    %v483 = vlaneseq
    %v484 = vshrl.u32 %v483, 7
    %v485 = vsub.s32 0, %v484
    %v486 = vrot.slane %v481, %v485
    %v488 = vmul.f32 %v479, %v486
    %v489 = vmul.f32 %v480, %v486
    %vm490 = vcmask 523264
    %v491 = vsel %vm490, %v488, 0.0
    %492 = vadd.xlane.f32.xlu0 %v491
    %v493 = vpop.xlane.xlu0 %492
    %v494 = vsel %vm490, %v489, 0.0
    %495 = vadd.xlane.f32.xlu0 %v494
    %v496 = vpop.xlane.xlu0 %495
    %v497 = vld [vmem:[#allocation2] sm:$0x1]
    %v499 = vlaneseq
    %v500 = vshrl.u32 %v499, 7
    %v501 = vsub.s32 0, %v500
    %v502 = vrot.slane %v497, %v501
    %v504 = vadd.f32 %v493, %v502
    %v505 = vadd.f32 %v496, %v502
    %v506 = vsub.f32 0.0, %v504
    %v507 = vsub.f32 0.0, %v505
    %v508 = vmul.f32 %v506, 1.442695
    %v509 = vpow.pop %v508
    %v510 = vmul.f32 %v507, 1.442695
    %v511 = vpow.pop %v510
    %v512 = vadd.f32 %v509, 1.0
    %v513 = vadd.f32 %v511, 1.0
    %v514 = vrcp.pop %v512
    %v515 = vrcp.pop %v513
    %v516 = vmax.f32 %v514, 0.0
    %v517 = vmax.f32 %v515, 0.0
    %v518 = vmin.f32 %v516, 1.0
    %v519 = vmin.f32 %v517, 1.0
    %521 = vset.pattern.permute.xlu0 0
    %522 = vperm.xlu0 %521, %v518
    %v523 = vpop.permute.xlu0 %522
    %526 = vset.pattern.permute.xlu0 0
    %527 = vperm.xlu0 %526, %v519
    %v528 = vpop.permute.xlu0 %527
    %vm530 = vcmask 64512
    %531 = vst.msk [vmem:[%s9] sm:$0xff] %vm530, %v523
    %532 = vst.msk [vmem:[%s9 + $0x8] sm:$0xff] %vm530, %v528
    // Predicated region
    $region42: #{tpu_custom_call.1} parent=1 // pred_check
      _
    $region43: #{tpu_custom_call.1} parent=1 // pred_check_branch
      %534 = sbr.rel (0) target = $region45
    $region44: #{tpu_custom_call.1} parent=1 // pred_region
      _
    $region45: #{tpu_custom_call.1} parent=1 // pred_fallthru
      _
    // Predicated region
    $region46: #{tpu_custom_call.1} parent=1 // pred_check
      _
    $region47: #{tpu_custom_call.1} parent=1 // pred_check_branch
      %536 = sbr.rel (0) target = $region49
    $region48: #{tpu_custom_call.1} parent=1 // pred_region
      _
    $region49: #{tpu_custom_call.1} parent=1 // pred_fallthru
      _
    %537 = vsyncpa [#allocation4], 1

</llo_original>
